<compile_context>
chip_gen: v6e
topology: v6e:2x2x1
jax: 0.10.0
libtpu: 0.0.40
codegen_flags: <defaults>
</compile_context>

<pallas_src>
import jax
import jax.numpy as jnp
from jax.experimental import pallas as pl
from jax.experimental.pallas import tpu as pltpu

LANE = 128  # TPU vreg lane width


def qnetwork_kernel(x_ref, w1_ref, b1_ref, w2_ref, b2_ref, w3_ref, b3_ref, out_ref):
    # Layer 1: Linear (bf16 operands, f32 accumulate) + bias + ReLU in f32.
    h1 = jnp.dot(x_ref[...], w1_ref[...], preferred_element_type=jnp.float32)
    h1 = jnp.maximum(h1 + b1_ref[...], 0.0).astype(jnp.bfloat16)
    # Layer 2
    h2 = jnp.dot(h1, w2_ref[...], preferred_element_type=jnp.float32)
    h2 = jnp.maximum(h2 + b2_ref[...], 0.0).astype(jnp.bfloat16)
    # Layer 3: Q-values (no activation); output columns are lane-padded to 128.
    q = jnp.dot(h2, w3_ref[...], preferred_element_type=jnp.float32)
    out_ref[...] = (q + b3_ref[...]).astype(out_ref.dtype)


def qnetwork_forward(x, params, *, tb_target=512):
    """x: (batch, state_dim) float32. params: transposed f32 weights/biases."""
    w1, b1, w2, b2, w3, b3 = (
        params["w1"], params["b1"], params["w2"],
        params["b2"], params["w3"], params["b3"],
    )
    batch, state_dim = x.shape
    hidden = w1.shape[1]
    action_dim = w3.shape[1]

    # ---- lane-dense output: pad action_dim up to a multiple of 128 ----
    out_p = pl.cdiv(action_dim, LANE) * LANE

    # ---- batch tiling: TB multiple of 8, pad batch up to a multiple of TB ----
    batch8 = pl.cdiv(batch, 8) * 8
    tb = min(tb_target, batch8)
    batch_p = pl.cdiv(batch8, tb) * tb
    grid = (batch_p // tb,)

    # ---- cast streaming/matmul operands to bf16; pad where needed ----
    x_p = jnp.zeros((batch_p, state_dim), jnp.bfloat16).at[:batch].set(
        x.astype(jnp.bfloat16))
    w1_b = w1.astype(jnp.bfloat16)
    w2_b = w2.astype(jnp.bfloat16)
    w3_p = jnp.zeros((hidden, out_p), jnp.bfloat16).at[:, :action_dim].set(
        w3.astype(jnp.bfloat16))
    b3_p = jnp.zeros((1, out_p), jnp.float32).at[:, :action_dim].set(b3)

    # ---- advisory cost estimate for the XLA scheduler ----
    flops = 2 * batch_p * (state_dim * hidden + hidden * hidden + hidden * out_p)
    bytes_accessed = (
        x_p.size * 2 + w1_b.size * 2 + w2_b.size * 2 + w3_p.size * 2
        + b1.size * 4 + b2.size * 4 + b3_p.size * 4
        + batch_p * out_p * 4
    )
    cost = pl.CostEstimate(flops=flops, transcendentals=0,
                           bytes_accessed=bytes_accessed)

    const2d = lambda shape: pl.BlockSpec(shape, lambda i: (0, 0))

    out = pl.pallas_call(
        qnetwork_kernel,
        out_shape=jax.ShapeDtypeStruct((batch_p, out_p), jnp.float32),
        grid=grid,
        in_specs=[
            pl.BlockSpec((tb, state_dim), lambda i: (i, 0)),   # streamed batch tiles
            const2d(w1_b.shape), const2d(b1.shape),            # resident weights
            const2d(w2_b.shape), const2d(b2.shape),
            const2d(w3_p.shape), const2d(b3_p.shape),
        ],
        out_specs=pl.BlockSpec((tb, out_p), lambda i: (i, 0)),
        compiler_params=pltpu.CompilerParams(
            dimension_semantics=("parallel",)),                # v7x dual-TC sharding
        cost_estimate=cost,
    )(x_p, w1_b, b1, w2_b, b2, w3_p, b3_p)

    # strip batch / action-dim padding
    return out[:batch, :action_dim]


def init_params(key, state_dim, action_dim, hidden_dim=64):
    """nn.Linear-style init (uniform +/- 1/sqrt(fan_in)); weights stored as
    (in_features, out_features) == PyTorch weight.T."""
    ks = jax.random.split(key, 6)

    def linear(kw, kb, fan_in, fan_out):
        bound = 1.0 / jnp.sqrt(jnp.float32(fan_in))
        w = jax.random.uniform(kw, (fan_in, fan_out), jnp.float32, -bound, bound)
        b = jax.random.uniform(kb, (1, fan_out), jnp.float32, -bound, bound)
        return w, b

    w1, b1 = linear(ks[0], ks[1], state_dim, hidden_dim)
    w2, b2 = linear(ks[2], ks[3], hidden_dim, hidden_dim)
    w3, b3 = linear(ks[4], ks[5], hidden_dim, action_dim)
    return {"w1": w1, "b1": b1, "w2": w2, "b2": b2, "w3": w3, "b3": b3}


def reference_forward(x, params):
    """Mirrors the kernel's bf16-operand / f32-accumulate math."""
    c = lambda a: a.astype(jnp.bfloat16)
    h1 = jnp.dot(c(x), c(params["w1"]), preferred_element_type=jnp.float32)
    h1 = jnp.maximum(h1 + params["b1"], 0.0)
    h2 = jnp.dot(c(h1), c(params["w2"]), preferred_element_type=jnp.float32)
    h2 = jnp.maximum(h2 + params["b2"], 0.0)
    q = jnp.dot(c(h2), c(params["w3"]), preferred_element_type=jnp.float32)
    return q + params["b3"]


if __name__ == "__main__":
    key = jax.random.PRNGKey(0)
    k_params, k_x = jax.random.split(key)

    batch, state_dim, action_dim, hidden_dim = 2, 8, 4, 64

    params = init_params(k_params, state_dim, action_dim, hidden_dim)
    x = jax.random.normal(k_x, (batch, state_dim), jnp.float32)

    out = qnetwork_forward(x, params)
    out = jax.block_until_ready(out)

    ref = reference_forward(x, params)
    assert out.shape == (batch, action_dim), out.shape
    assert jnp.allclose(out, ref, atol=1e-2, rtol=1e-2), "mismatch vs reference"

    print("KERNEL_OK")
</pallas_src>

<mosaic_0001>
module attributes {stable_mosaic.version = 11 : i64} {
  func.func @qnetwork_kernel(%arg0: i32, %arg1: memref<8x8xbf16, #tpu.memory_space<vmem>>, %arg2: memref<8x64xbf16, #tpu.memory_space<vmem>>, %arg3: memref<1x64xf32, #tpu.memory_space<vmem>>, %arg4: memref<64x64xbf16, #tpu.memory_space<vmem>>, %arg5: memref<1x64xf32, #tpu.memory_space<vmem>>, %arg6: memref<64x128xbf16, #tpu.memory_space<vmem>>, %arg7: memref<1x128xf32, #tpu.memory_space<vmem>>, %arg8: memref<8x128xf32, #tpu.memory_space<vmem>>) attributes {dimension_semantics = [#tpu.dimension_semantics<parallel>], iteration_bounds = array<i64: 1>, scalar_prefetch = 0 : i64, scratch_operands = 0 : i64, tpu.core_type = #tpu.core_type<tc>, window_params = [{transform_indices = @transform_0, window_bounds = array<i64: 8, 8>}, {pipeline_mode = #tpu.pipeline_mode<synchronous>, transform_indices = @transform_1, window_bounds = array<i64: 8, 64>}, {pipeline_mode = #tpu.pipeline_mode<synchronous>, transform_indices = @transform_2, window_bounds = array<i64: 1, 64>}, {pipeline_mode = #tpu.pipeline_mode<synchronous>, transform_indices = @transform_3, window_bounds = array<i64: 64, 64>}, {pipeline_mode = #tpu.pipeline_mode<synchronous>, transform_indices = @transform_4, window_bounds = array<i64: 1, 64>}, {pipeline_mode = #tpu.pipeline_mode<synchronous>, transform_indices = @transform_5, window_bounds = array<i64: 64, 128>}, {pipeline_mode = #tpu.pipeline_mode<synchronous>, transform_indices = @transform_6, window_bounds = array<i64: 1, 128>}, {transform_indices = @transform_7, window_bounds = array<i64: 8, 128>}]} {
    %c0 = arith.constant 0 : index
    %c0_0 = arith.constant 0 : index
    %0 = vector.load %arg1[%c0, %c0_0] : memref<8x8xbf16, #tpu.memory_space<vmem>>, vector<8x8xbf16>
    %c0_1 = arith.constant 0 : index
    %c0_2 = arith.constant 0 : index
    %1 = vector.load %arg2[%c0_1, %c0_2] : memref<8x64xbf16, #tpu.memory_space<vmem>>, vector<8x64xbf16>
    %cst = arith.constant dense<0.000000e+00> : vector<8x64xf32>
    %2 = tpu.matmul %0, %1, %cst {dimension_numbers = #tpu.dot_dimension_numbers<[1], [0], [0], [1], [0, 0, 1, 1], [], []>} : vector<8x8xbf16>, vector<8x64xbf16>, vector<8x64xf32> -> vector<8x64xf32>
    %c0_3 = arith.constant 0 : index
    %c0_4 = arith.constant 0 : index
    %3 = vector.load %arg3[%c0_3, %c0_4] : memref<1x64xf32, #tpu.memory_space<vmem>>, vector<1x64xf32>
    %4 = vector.broadcast %3 : vector<1x64xf32> to vector<8x64xf32>
    %5 = arith.addf %2, %4 : vector<8x64xf32>
    %cst_5 = arith.constant 0.000000e+00 : f32
    %6 = vector.broadcast %cst_5 : f32 to vector<8x64xf32>
    %7 = arith.maximumf %5, %6 : vector<8x64xf32>
    %8 = arith.truncf %7 : vector<8x64xf32> to vector<8x64xbf16>
    %c0_6 = arith.constant 0 : index
    %c0_7 = arith.constant 0 : index
    %9 = vector.load %arg4[%c0_6, %c0_7] : memref<64x64xbf16, #tpu.memory_space<vmem>>, vector<64x64xbf16>
    %cst_8 = arith.constant dense<0.000000e+00> : vector<8x64xf32>
    %10 = tpu.matmul %8, %9, %cst_8 {dimension_numbers = #tpu.dot_dimension_numbers<[1], [0], [0], [1], [0, 0, 1, 1], [], []>} : vector<8x64xbf16>, vector<64x64xbf16>, vector<8x64xf32> -> vector<8x64xf32>
    %c0_9 = arith.constant 0 : index
    %c0_10 = arith.constant 0 : index
    %11 = vector.load %arg5[%c0_9, %c0_10] : memref<1x64xf32, #tpu.memory_space<vmem>>, vector<1x64xf32>
    %12 = vector.broadcast %11 : vector<1x64xf32> to vector<8x64xf32>
    %13 = arith.addf %10, %12 : vector<8x64xf32>
    %cst_11 = arith.constant 0.000000e+00 : f32
    %14 = vector.broadcast %cst_11 : f32 to vector<8x64xf32>
    %15 = arith.maximumf %13, %14 : vector<8x64xf32>
    %16 = arith.truncf %15 : vector<8x64xf32> to vector<8x64xbf16>
    %c0_12 = arith.constant 0 : index
    %c0_13 = arith.constant 0 : index
    %17 = vector.load %arg6[%c0_12, %c0_13] : memref<64x128xbf16, #tpu.memory_space<vmem>>, vector<64x128xbf16>
    %cst_14 = arith.constant dense<0.000000e+00> : vector<8x128xf32>
    %18 = tpu.matmul %16, %17, %cst_14 {dimension_numbers = #tpu.dot_dimension_numbers<[1], [0], [0], [1], [0, 0, 1, 1], [], []>} : vector<8x64xbf16>, vector<64x128xbf16>, vector<8x128xf32> -> vector<8x128xf32>
    %c0_15 = arith.constant 0 : index
    %c0_16 = arith.constant 0 : index
    %19 = vector.load %arg7[%c0_15, %c0_16] : memref<1x128xf32, #tpu.memory_space<vmem>>, vector<1x128xf32>
    %20 = vector.broadcast %19 : vector<1x128xf32> to vector<8x128xf32>
    %21 = arith.addf %18, %20 : vector<8x128xf32>
    %c0_17 = arith.constant 0 : index
    %c0_18 = arith.constant 0 : index
    %22 = vector.load %arg8[%c0_17, %c0_18] : memref<8x128xf32, #tpu.memory_space<vmem>>, vector<8x128xf32>
    tpu.vector_store %arg8[%c0_17, %c0_18], %21 {strides = array<i32>} : memref<8x128xf32, #tpu.memory_space<vmem>>, vector<8x128xf32>,
    return
  }
  func.func @transform_0(%arg0: i32) -> (i32, i32) {
    %c0_i32 = arith.constant 0 : i32
    %c0_i32_0 = arith.constant 0 : i32
    return %arg0, %c0_i32 : i32, i32
  }
  func.func @transform_1(%arg0: i32) -> (i32, i32) {
    %c0_i32 = arith.constant 0 : i32
    %c0_i32_0 = arith.constant 0 : i32
    %c0_i32_1 = arith.constant 0 : i32
    return %c0_i32, %c0_i32_0 : i32, i32
  }
  func.func @transform_2(%arg0: i32) -> (i32, i32) {
    %c0_i32 = arith.constant 0 : i32
    %c0_i32_0 = arith.constant 0 : i32
    %c0_i32_1 = arith.constant 0 : i32
    return %c0_i32, %c0_i32_0 : i32, i32
  }
  func.func @transform_3(%arg0: i32) -> (i32, i32) {
    %c0_i32 = arith.constant 0 : i32
    %c0_i32_0 = arith.constant 0 : i32
    %c0_i32_1 = arith.constant 0 : i32
    return %c0_i32, %c0_i32_0 : i32, i32
  }
  func.func @transform_4(%arg0: i32) -> (i32, i32) {
    %c0_i32 = arith.constant 0 : i32
    %c0_i32_0 = arith.constant 0 : i32
    %c0_i32_1 = arith.constant 0 : i32
    return %c0_i32, %c0_i32_0 : i32, i32
  }
  func.func @transform_5(%arg0: i32) -> (i32, i32) {
    %c0_i32 = arith.constant 0 : i32
    %c0_i32_0 = arith.constant 0 : i32
    %c0_i32_1 = arith.constant 0 : i32
    return %c0_i32, %c0_i32_0 : i32, i32
  }
  func.func @transform_6(%arg0: i32) -> (i32, i32) {
    %c0_i32 = arith.constant 0 : i32
    %c0_i32_0 = arith.constant 0 : i32
    %c0_i32_1 = arith.constant 0 : i32
    return %c0_i32, %c0_i32_0 : i32, i32
  }
  func.func @transform_7(%arg0: i32) -> (i32, i32) {
    %c0_i32 = arith.constant 0 : i32
    %c0_i32_0 = arith.constant 0 : i32
    return %arg0, %c0_i32 : i32, i32
  }
}

</mosaic_0001>

<llo_original>
// kernel: tpu_custom_call.1
$region0: #{tpu_custom_call.1}
  #allocation0 [shape = 'u32[]', space=smem, size = 0x4, offset = 0x4, fixed_abs, tag = 'smem constant byte address 0x4 - core index']
  #allocation1 [shape = 'u32[144,128]{1,0:T(1,128)}', space=vmem, size = 0x12000, scoped, tag = 'internal scratch']
  %s0 = inlined_call_operand.hbm [shape: bf16[8,8], index: 0, kind: input, shape index: {}]
  %s1 = inlined_call_operand.hbm [shape: bf16[8,64], index: 1, kind: input, shape index: {}]
  %s2 = inlined_call_operand.vmem [shape: f32[1,64], index: 2, kind: input, shape index: {}]
  %s3 = inlined_call_operand.hbm [shape: bf16[64,64], index: 3, kind: input, shape index: {}]
  %s4 = inlined_call_operand.vmem [shape: f32[1,64], index: 4, kind: input, shape index: {}]
  %s5 = inlined_call_operand.hbm [shape: bf16[64,128], index: 5, kind: input, shape index: {}]
  %s6 = inlined_call_operand.vmem [shape: f32[1,128], index: 6, kind: input, shape index: {}]
  %s7 = inlined_call_operand.hbm [shape: f32[8,128], index: 7, kind: output, shape index: {}]
  %s8 = sld [smem:[#allocation0]]
  $region54: #{tpu_custom_call.1} parent=0
    _
  %s10 = ssub.s32 1, %s8
  %s11 = scalar_select 0, %s10, %s8
  $region1: #{tpu_custom_call.1} parent=0
    #allocation2 [shape = 'u8[2048]{0}', space=vmem, size = 0x800, scoped, tag = 'input window, operand 0, single buffered']
    #allocation3 [shape = 's32[1]{0}', space=sflag, size = 0x4, scoped, tag = 'scoped memory for tpu_custom_call.1']
    #allocation4 [shape = 's32[1]{0}', space=sflag, size = 0x4, scoped, tag = 'scoped memory for tpu_custom_call.1']
    #allocation5 [shape = 'u8[2048]{0}', space=vmem, size = 0x800, scoped, tag = 'input window, operand 1, single buffered']
    #allocation6 [shape = 's32[1]{0}', space=sflag, size = 0x4, scoped, tag = 'scoped memory for tpu_custom_call.1']
    #allocation7 [shape = 'u8[16384]{0}', space=vmem, size = 0x4000, scoped, tag = 'input window, operand 3, single buffered']
    #allocation8 [shape = 'u8[16384]{0}', space=vmem, size = 0x4000, scoped, tag = 'input window, operand 5, single buffered']
    #allocation9 [shape = 's32[1]{0}', space=sflag, size = 0x4, scoped, tag = 'scoped memory for tpu_custom_call.1']
    #allocation10 [shape = 'u8[4096]{0}', space=vmem, size = 0x1000, scoped, tag = 'output window, operand 0, single buffered']
    %12 = vsyncpa [#allocation3], 0
    %13 = vsyncpa [#allocation6], 0
    %14 = vsyncpa [#allocation9], 0
    %15 = vsyncpa [#allocation4], 0
    // Predicated region
    $region2: #{tpu_custom_call.1} parent=1 // pred_check
      _
    $region3: #{tpu_custom_call.1} parent=1 // pred_check_branch
      %17 = sbr.rel (0) target = $region5
    $region4: #{tpu_custom_call.1} parent=1 // pred_region
      %s19 = ssub.s32 64, 64
      %20 = vsyncadd [#allocation3], %s19
      %s22 = sshll.u32 [#allocation2], 4
      %s23 = int_to_ptr.vmem [resolvable:$true] %s22
      %25 = dma.hbm_to_vmem [thread:$0]  %s0, 64, %s23, [#allocation3]
    $region5: #{tpu_custom_call.1} parent=1 // pred_fallthru
      _
    // Predicated region
    $region6: #{tpu_custom_call.1} parent=1 // pred_check
      _
    $region7: #{tpu_custom_call.1} parent=1 // pred_check_branch
      %27 = sbr.rel (0) target = $region9
    $region8: #{tpu_custom_call.1} parent=1 // pred_region
      %s29 = ssub.s32 64, 64
      %30 = vsyncadd [#allocation6], %s29
      %s32 = sshll.u32 [#allocation5], 4
      %s33 = int_to_ptr.vmem [resolvable:$true] %s32
      %35 = dma.hbm_to_vmem [thread:$0]  %s1, 64, %s33, [#allocation6]
    $region9: #{tpu_custom_call.1} parent=1 // pred_fallthru
      _
    // Predicated region
    $region10: #{tpu_custom_call.1} parent=1 // pred_check
      _
    $region11: #{tpu_custom_call.1} parent=1 // pred_check_branch
      %37 = sbr.rel (0) target = $region13
    $region12: #{tpu_custom_call.1} parent=1 // pred_region
      _
    $region13: #{tpu_custom_call.1} parent=1 // pred_fallthru
      _
    // Predicated region
    $region14: #{tpu_custom_call.1} parent=1 // pred_check
      _
    $region15: #{tpu_custom_call.1} parent=1 // pred_check_branch
      %39 = sbr.rel (0) target = $region17
    $region16: #{tpu_custom_call.1} parent=1 // pred_region
      %s41 = ssub.s32 512, 512
      %42 = vsyncadd [#allocation6], %s41
      %s43 = sshll.u32 [#allocation7], 4
      %s44 = int_to_ptr.vmem [resolvable:$true] %s43
      %49 = dma.hbm_to_vmem [thread:$0]  %s3, 512, %s44, [#allocation6], 64, 64, 4
    $region17: #{tpu_custom_call.1} parent=1 // pred_fallthru
      _
    // Predicated region
    $region18: #{tpu_custom_call.1} parent=1 // pred_check
      _
    $region19: #{tpu_custom_call.1} parent=1 // pred_check_branch
      %51 = sbr.rel (0) target = $region21
    $region20: #{tpu_custom_call.1} parent=1 // pred_region
      _
    $region21: #{tpu_custom_call.1} parent=1 // pred_fallthru
      _
    // Predicated region
    $region22: #{tpu_custom_call.1} parent=1 // pred_check
      _
    $region23: #{tpu_custom_call.1} parent=1 // pred_check_branch
      %53 = sbr.rel (0) target = $region25
    $region24: #{tpu_custom_call.1} parent=1 // pred_region
      %s55 = ssub.s32 512, 512
      %56 = vsyncadd [#allocation9], %s55
      %s57 = sshll.u32 [#allocation8], 4
      %s58 = int_to_ptr.vmem [resolvable:$true] %s57
      %63 = dma.hbm_to_vmem [thread:$0]  %s5, 512, %s58, [#allocation9], 64, 64, 4
    $region25: #{tpu_custom_call.1} parent=1 // pred_fallthru
      _
    // Predicated region
    $region26: #{tpu_custom_call.1} parent=1 // pred_check
      _
    $region27: #{tpu_custom_call.1} parent=1 // pred_check_branch
      %65 = sbr.rel (0) target = $region29
    $region28: #{tpu_custom_call.1} parent=1 // pred_region
      _
    $region29: #{tpu_custom_call.1} parent=1 // pred_fallthru
      _
    // Predicated region
    $region30: #{tpu_custom_call.1} parent=1 // pred_check
      _
    $region31: #{tpu_custom_call.1} parent=1 // pred_check_branch
      %67 = sbr.rel (0) target = $region33
    $region32: #{tpu_custom_call.1} parent=1 // pred_region
      %68 = dma.done [#allocation3], 64
    $region33: #{tpu_custom_call.1} parent=1 // pred_fallthru
      _
    // Predicated region
    $region34: #{tpu_custom_call.1} parent=1 // pred_check
      _
    $region35: #{tpu_custom_call.1} parent=1 // pred_check_branch
      %70 = sbr.rel (0) target = $region37
    $region36: #{tpu_custom_call.1} parent=1 // pred_region
      %71 = dma.done [#allocation6], 64
    $region37: #{tpu_custom_call.1} parent=1 // pred_fallthru
      _
    // Predicated region
    $region38: #{tpu_custom_call.1} parent=1 // pred_check
      _
    $region39: #{tpu_custom_call.1} parent=1 // pred_check_branch
      %73 = sbr.rel (0) target = $region41
    $region40: #{tpu_custom_call.1} parent=1 // pred_region
      %74 = dma.done [#allocation6], 512
    $region41: #{tpu_custom_call.1} parent=1 // pred_fallthru
      _
    // Predicated region
    $region42: #{tpu_custom_call.1} parent=1 // pred_check
      _
    $region43: #{tpu_custom_call.1} parent=1 // pred_check_branch
      %76 = sbr.rel (0) target = $region45
    $region44: #{tpu_custom_call.1} parent=1 // pred_region
      %77 = dma.done [#allocation9], 512
    $region45: #{tpu_custom_call.1} parent=1 // pred_fallthru
      _
    %v79 = vld [vmem:[#allocation2] sm:$0xf]
    %v80 = vld [vmem:[#allocation5] sm:$0xf]
    %v81 = vld [vmem:[%s2] sm:$0x1]
    %v83 = vlaneseq
    %v84 = vshrl.u32 %v83, 7
    %v85 = vsub.s32 0, %v84
    %v86 = vrot.slane %v81, %v85
    %vm88 = vcmask 64512
    %v90 = vsel %vm88, %v79, 0
    %vm92 = vcmask 1043456
    %v94 = vsel %vm92, %v80, 0
    %96 = vmatprep.subr.bf16.mxu0 0
    %97 = vmatpush1.bf16.msra.mxu0 0
    %98 = vmatprep.subr.bf16.mxu0 0
    %99 = vmatpush1.bf16.msra.mxu0 0
    %100 = vmatprep.subr.bf16.mxu0 0
    %101 = vmatpush1.bf16.msra.mxu0 0
    %102 = vmatprep.subr.bf16.mxu0 0
    %103 = vmatpush1.bf16.msra.mxu0 0
    %104 = vmatprep.subr.bf16.mxu0 0
    %105 = vmatpush1.bf16.msra.mxu0 0
    %106 = vmatprep.subr.bf16.mxu0 0
    %107 = vmatpush1.bf16.msra.mxu0 0
    %108 = vmatprep.subr.bf16.mxu0 0
    %109 = vmatpush1.bf16.msra.mxu0 0
    %110 = vmatprep.subr.bf16.mxu0 0
    %111 = vmatpush1.bf16.msra.mxu0 %v94
    %112 = vmatprep.subr.bf16.mxu0 0
    %113 = vmatpush2.bf16.msra.mxu0 0
    %114 = vmatprep.subr.bf16.mxu0 0
    %115 = vmatpush2.bf16.msra.mxu0 0
    %116 = vmatprep.subr.bf16.mxu0 0
    %117 = vmatpush2.bf16.msra.mxu0 0
    %118 = vmatprep.subr.bf16.mxu0 0
    %119 = vmatpush2.bf16.msra.mxu0 0
    %120 = vmatprep.subr.bf16.mxu0 0
    %121 = vmatpush2.bf16.msra.mxu0 0
    %122 = vmatprep.subr.bf16.mxu0 0
    %123 = vmatpush2.bf16.msra.mxu0 0
    %124 = vmatprep.subr.bf16.mxu0 0
    %125 = vmatpush2.bf16.msra.mxu0 0
    %126 = vmatprep.subr.bf16.mxu0 0
    %127 = vmatpush2.bf16.msra.mxu0 0
    %128 = vmatprep.mubr.bf16.mxu0 0
    %129 = vmatmul.mubr.bf16.gmra.mxu0 %v90
    %v130 = vpop.f32.mrf.mxu0
    %v131 = vadd.f32 %v86, %v130
    %v132 = vpop.f32.mrf.mxu0
    %v133 = vpop.f32.mrf.mxu0
    %v134 = vpop.f32.mrf.mxu0
    %135 = vdwg.mxu0
    %v136 = vmax.f32 %v131, 0.0
    %v137 = vpack.c.bf16 %v136, %v136
    %v138 = vld [vmem:[#allocation7] sm:$0xf]
    %v139 = vld [vmem:[#allocation7 + $0x4] sm:$0xf]
    %v140 = vld [vmem:[#allocation7 + $0x8] sm:$0xf]
    %v141 = vld [vmem:[#allocation7 + $0xc] sm:$0xf]
    %v142 = vld [vmem:[#allocation7 + $0x10] sm:$0xf]
    %v143 = vld [vmem:[#allocation7 + $0x14] sm:$0xf]
    %v144 = vld [vmem:[#allocation7 + $0x18] sm:$0xf]
    %v145 = vld [vmem:[#allocation7 + $0x1c] sm:$0xf]
    %v146 = vld [vmem:[%s4] sm:$0x1]
    %v148 = vlaneseq
    %v149 = vshrl.u32 %v148, 7
    %v150 = vsub.s32 0, %v149
    %v151 = vrot.slane %v146, %v150
    %v161 = vunpack.c.l.b16 %v138
    %v162 = vunpack.c.l.b16 %v139
    %v163 = vunpack.c.l.b16 %v140
    %v164 = vunpack.c.l.b16 %v141
    %v165 = vunpack.c.l.b16 %v142
    %v166 = vunpack.c.l.b16 %v143
    %v167 = vunpack.c.l.b16 %v144
    %v168 = vunpack.c.l.b16 %v145
    %v169 = vpack.c.b16 %v162, %v161
    %v170 = vpack.c.b16 %v164, %v163
    %v171 = vpack.c.b16 %v166, %v165
    %v172 = vpack.c.b16 %v168, %v167
    %vm177 = vcmask 523264
    %v179 = vsel %vm177, %v137, 0
    %181 = vmatprep.subr.bf16.mxu0 0
    %182 = vmatpush1.bf16.msra.mxu0 0
    %183 = vmatprep.subr.bf16.mxu0 0
    %184 = vmatpush1.bf16.msra.mxu0 0
    %185 = vmatprep.subr.bf16.mxu0 0
    %186 = vmatpush1.bf16.msra.mxu0 0
    %187 = vmatprep.subr.bf16.mxu0 0
    %188 = vmatpush1.bf16.msra.mxu0 0
    %189 = vmatprep.subr.bf16.mxu0 0
    %190 = vmatpush1.bf16.msra.mxu0 %v172
    %191 = vmatprep.subr.bf16.mxu0 0
    %192 = vmatpush1.bf16.msra.mxu0 %v171
    %193 = vmatprep.subr.bf16.mxu0 0
    %194 = vmatpush1.bf16.msra.mxu0 %v170
    %195 = vmatprep.subr.bf16.mxu0 0
    %196 = vmatpush1.bf16.msra.mxu0 %v169
    %197 = vmatprep.subr.bf16.mxu0 0
    %198 = vmatpush2.bf16.msra.mxu0 0
    %199 = vmatprep.subr.bf16.mxu0 0
    %200 = vmatpush2.bf16.msra.mxu0 0
    %201 = vmatprep.subr.bf16.mxu0 0
    %202 = vmatpush2.bf16.msra.mxu0 0
    %203 = vmatprep.subr.bf16.mxu0 0
    %204 = vmatpush2.bf16.msra.mxu0 0
    %205 = vmatprep.subr.bf16.mxu0 0
    %206 = vmatpush2.bf16.msra.mxu0 0
    %207 = vmatprep.subr.bf16.mxu0 0
    %208 = vmatpush2.bf16.msra.mxu0 0
    %209 = vmatprep.subr.bf16.mxu0 0
    %210 = vmatpush2.bf16.msra.mxu0 0
    %211 = vmatprep.subr.bf16.mxu0 0
    %212 = vmatpush2.bf16.msra.mxu0 0
    %213 = vmatprep.mubr.bf16.mxu0 0
    %214 = vmatmul.mubr.bf16.gmra.mxu0 %v179
    %v215 = vpop.f32.mrf.mxu0
    %v216 = vadd.f32 %v151, %v215
    %v217 = vpop.f32.mrf.mxu0
    %v218 = vpop.f32.mrf.mxu0
    %v219 = vpop.f32.mrf.mxu0
    %220 = vdwg.mxu0
    %v221 = vmax.f32 %v216, 0.0
    %v222 = vpack.c.bf16 %v221, %v221
    %v223 = vld [vmem:[#allocation8] sm:$0xf]
    %v224 = vld [vmem:[#allocation8 + $0x4] sm:$0xf]
    %v225 = vld [vmem:[#allocation8 + $0x8] sm:$0xf]
    %v226 = vld [vmem:[#allocation8 + $0xc] sm:$0xf]
    %v227 = vld [vmem:[#allocation8 + $0x10] sm:$0xf]
    %v228 = vld [vmem:[#allocation8 + $0x14] sm:$0xf]
    %v229 = vld [vmem:[#allocation8 + $0x18] sm:$0xf]
    %v230 = vld [vmem:[#allocation8 + $0x1c] sm:$0xf]
    %v231 = vld [vmem:[%s6] sm:$0x1]
    %v233 = vlaneseq
    %v234 = vshrl.u32 %v233, 7
    %v235 = vsub.s32 0, %v234
    %v236 = vrot.slane %v231, %v235
    %v246 = vunpack.c.l.b16 %v223
    %v247 = vunpack.c.l.b16 %v224
    %v248 = vunpack.c.l.b16 %v225
    %v249 = vunpack.c.l.b16 %v226
    %v250 = vunpack.c.l.b16 %v227
    %v251 = vunpack.c.l.b16 %v228
    %v252 = vunpack.c.l.b16 %v229
    %v253 = vunpack.c.l.b16 %v230
    %v254 = vpack.c.b16 %v247, %v246
    %v255 = vpack.c.b16 %v249, %v248
    %v256 = vpack.c.b16 %v251, %v250
    %v257 = vpack.c.b16 %v253, %v252
    %v263 = vsel %vm177, %v222, 0
    %265 = vmatprep.subr.bf16.mxu0 0
    %266 = vmatpush1.bf16.msra.mxu0 0
    %267 = vmatprep.subr.bf16.mxu0 0
    %268 = vmatpush1.bf16.msra.mxu0 0
    %269 = vmatprep.subr.bf16.mxu0 0
    %270 = vmatpush1.bf16.msra.mxu0 0
    %271 = vmatprep.subr.bf16.mxu0 0
    %272 = vmatpush1.bf16.msra.mxu0 0
    %273 = vmatprep.subr.bf16.mxu0 0
    %274 = vmatpush1.bf16.msra.mxu0 %v257
    %275 = vmatprep.subr.bf16.mxu0 0
    %276 = vmatpush1.bf16.msra.mxu0 %v256
    %277 = vmatprep.subr.bf16.mxu0 0
    %278 = vmatpush1.bf16.msra.mxu0 %v255
    %279 = vmatprep.subr.bf16.mxu0 0
    %280 = vmatpush1.bf16.msra.mxu0 %v254
    %281 = vmatprep.subr.bf16.mxu0 0
    %282 = vmatpush2.bf16.msra.mxu0 0
    %283 = vmatprep.subr.bf16.mxu0 0
    %284 = vmatpush2.bf16.msra.mxu0 0
    %285 = vmatprep.subr.bf16.mxu0 0
    %286 = vmatpush2.bf16.msra.mxu0 0
    %287 = vmatprep.subr.bf16.mxu0 0
    %288 = vmatpush2.bf16.msra.mxu0 0
    %289 = vmatprep.subr.bf16.mxu0 0
    %290 = vmatpush2.bf16.msra.mxu0 0
    %291 = vmatprep.subr.bf16.mxu0 0
    %292 = vmatpush2.bf16.msra.mxu0 0
    %293 = vmatprep.subr.bf16.mxu0 0
    %294 = vmatpush2.bf16.msra.mxu0 0
    %295 = vmatprep.subr.bf16.mxu0 0
    %296 = vmatpush2.bf16.msra.mxu0 0
    %297 = vmatprep.mubr.bf16.mxu0 0
    %298 = vmatmul.mubr.bf16.gmra.mxu0 %v263
    %v299 = vpop.f32.mrf.mxu0
    %v300 = vadd.f32 %v236, %v299
    %v301 = vpop.f32.mrf.mxu0
    %v302 = vpop.f32.mrf.mxu0
    %v303 = vpop.f32.mrf.mxu0
    %304 = vdwg.mxu0
    %305 = vst [vmem:[#allocation10] sm:$0xff] %v300
    // Predicated region
    $region46: #{tpu_custom_call.1} parent=1 // pred_check
      _
    $region47: #{tpu_custom_call.1} parent=1 // pred_check_branch
      %307 = sbr.rel (0) target = $region49
    $region48: #{tpu_custom_call.1} parent=1 // pred_region
      %s309 = ssub.s32 128, 128
      %310 = vsyncadd [#allocation4], %s309
      %s312 = sshll.u32 [#allocation10], 4
      %s313 = int_to_ptr.vmem [resolvable:$true] %s312
      %315 = dma.vmem_to_hbm [thread:$0]  %s313, 128, %s7, [#allocation4]
    $region49: #{tpu_custom_call.1} parent=1 // pred_fallthru
      _
    // Predicated region
    $region50: #{tpu_custom_call.1} parent=1 // pred_check
      _
    $region51: #{tpu_custom_call.1} parent=1 // pred_check_branch
      %317 = sbr.rel (0) target = $region53
    $region52: #{tpu_custom_call.1} parent=1 // pred_region
      %318 = dma.done [#allocation4], 128
    $region53: #{tpu_custom_call.1} parent=1 // pred_fallthru
      _
    %319 = vsyncpa [#allocation3], 1
    %320 = vsyncpa [#allocation6], 1
    %321 = vsyncpa [#allocation9], 1
    %322 = vsyncpa [#allocation4], 1

</llo_original>
